<compile_context>
chip_gen: v7x
topology: tpu7x:2x2x1
jax: 0.10.0
libtpu: 0.0.40
codegen_flags: <defaults>
</compile_context>

<pallas_src>
import jax
import jax.numpy as jnp
from jax.experimental import pallas as pl
from jax.experimental.pallas import tpu as pltpu


def _round_up(a, m):
    return (a + m - 1) // m * m


# --------------------------------------------------------------------------- #
# Kernel: one batch tile of rows through the fused 2-matmul MLP.
#   x_ref    : [TB, IN]        activations (f32)
#   w1b_ref  : [IN+1, H]       rows 0..IN-1 = W1, row IN = b1   (f32 or bf16)
#   w23b_ref : [H+1, OUT_PAD]  rows 0..H-1  = W2@W3, row H = b2@W3+b3
#   o_ref    : [TB, OUT_PAD]   Q-values (f32), padded lanes are zero
# --------------------------------------------------------------------------- #
def qnetwork_kernel(x_ref, w1b_ref, w23b_ref, o_ref):
    in_dim = x_ref.shape[1]
    hid = w1b_ref.shape[1]
    cdt = w1b_ref.dtype  # compute dtype for the MXU (f32 or bf16)

    x = x_ref[...].astype(cdt)

    # fc1 + bias (bias = last slab row) + ReLU; accumulate in f32 on the MXU.
    h1 = jnp.dot(x, w1b_ref[:in_dim, :], preferred_element_type=jnp.float32)
    h1 = h1 + w1b_ref[in_dim:in_dim + 1, :].astype(jnp.float32)
    h1 = jnp.maximum(h1, 0.0)

    # fused fc2∘fc3 (no nonlinearity between them in the original forward).
    q = jnp.dot(h1.astype(cdt), w23b_ref[:hid, :],
                preferred_element_type=jnp.float32)
    q = q + w23b_ref[hid:hid + 1, :].astype(jnp.float32)

    o_ref[...] = q.astype(o_ref.dtype)


# --------------------------------------------------------------------------- #
# Parameter packing (done once, outside the kernel).
# --------------------------------------------------------------------------- #
def pack_params(params, *, compute_dtype=jnp.float32, out_pad_to=16):
    """Fuse fc2/fc3 and pack (weight, bias) pairs into two slabs."""
    w1, b1 = params["w1"], params["b1"]          # [IN, H], [1, H]
    w2, b2 = params["w2"], params["b2"]          # [H, H/2], [1, H/2]
    w3, b3 = params["w3"], params["b3"]          # [H/2, OUT], [1, OUT]
    out_dim = w3.shape[1]

    # Exact algebraic fusion: (h@w2+b2)@w3+b3 == h@(w2@w3) + (b2@w3 + b3)
    w23 = w2 @ w3                                 # [H, OUT]
    b23 = b2 @ w3 + b3                            # [1, OUT]

    out_pad = max(out_pad_to, _round_up(out_dim, 8))   # 9 -> 16 lanes
    w23 = jnp.pad(w23, ((0, 0), (0, out_pad - out_dim)))
    b23 = jnp.pad(b23, ((0, 0), (0, out_pad - out_dim)))

    w1b = jnp.concatenate([w1, b1], axis=0).astype(compute_dtype)     # [IN+1, H]
    w23b = jnp.concatenate([w23, b23], axis=0).astype(compute_dtype)  # [H+1, OUT_PAD]
    return w1b, w23b, out_dim


# --------------------------------------------------------------------------- #
# Wrapper: batch-tiled pallas_call.
# --------------------------------------------------------------------------- #
def qnetwork_forward(x, w1b, w23b, out_dim, *, block_batch=512):
    """x: [B, IN] f32.  Returns Q-values [B, out_dim] f32."""
    B, in_dim = x.shape
    assert w1b.shape[0] == in_dim + 1
    hid = w1b.shape[1]
    assert w23b.shape[0] == hid + 1
    out_pad = w23b.shape[1]

    # Batch tile: multiple of 8 sublanes, capped at block_batch.
    tb = min(_round_up(int(block_batch), 8), _round_up(B, 8))
    bp = _round_up(B, tb)
    if bp != B:
        x = jnp.pad(x, ((0, bp - B), (0, 0)))

    grid = (bp // tb,)
    out = pl.pallas_call(
        qnetwork_kernel,
        out_shape=jax.ShapeDtypeStruct((bp, out_pad), jnp.float32),
        grid=grid,
        in_specs=[
            # activations: tiled along batch, streamed/double-buffered
            pl.BlockSpec((tb, in_dim), lambda i: (i, 0)),
            # weight slabs: constant block index -> loaded once, VMEM-resident
            pl.BlockSpec(w1b.shape, lambda i: (0, 0)),
            pl.BlockSpec(w23b.shape, lambda i: (0, 0)),
        ],
        out_specs=pl.BlockSpec((tb, out_pad), lambda i: (i, 0)),
        compiler_params=pltpu.CompilerParams(
            dimension_semantics=("parallel",)),   # shard batch tiles on v7x's 2 TCs
    )(x, w1b, w23b)

    return out[:B, :out_dim]


# --------------------------------------------------------------------------- #
# Init + host-side fuseState equivalent (glue, not in the kernel).
# --------------------------------------------------------------------------- #
def init_params(key, input_size, hidden_size, max_action):
    """Deterministic init mimicking nn.Linear's U(-1/sqrt(fan_in), 1/sqrt(fan_in))."""
    dims = [(input_size, hidden_size),
            (hidden_size, hidden_size // 2),
            (hidden_size // 2, max_action)]
    params = {}
    keys = jax.random.split(key, 2 * len(dims))
    for i, (fan_in, fan_out) in enumerate(dims):
        bound = 1.0 / (fan_in ** 0.5)
        # stored as [in, out] so the forward is x @ W + b
        params[f"w{i+1}"] = jax.random.uniform(
            keys[2 * i], (fan_in, fan_out), jnp.float32, -bound, bound)
        params[f"b{i+1}"] = jax.random.uniform(
            keys[2 * i + 1], (1, fan_out), jnp.float32, -bound, bound)
    return params


def fuse_state_ref(time, player_coord, player_hp, enemy_coord, bullet_coord,
                   bullet_angle):
    """JAX-side equivalent of QNetwork.fuseState (pure glue)."""
    parts = [jnp.asarray([time, player_coord[0], player_coord[1], player_hp],
                         jnp.float32)]
    parts.append(enemy_coord.reshape(-1).astype(jnp.float32))            # 2*maxEnemies
    bl = jnp.concatenate([bullet_coord, bullet_angle[:, None]], axis=1)  # [maxBullets, 3]
    parts.append(bl.reshape(-1).astype(jnp.float32))                     # 3*maxBullets
    return jnp.concatenate(parts)


if __name__ == "__main__":
    # synthetic mlData constants
    MAX_BULLETS = 8
    MAX_ENEMIES = 4
    STATE_SIZE = MAX_BULLETS * 3 + (MAX_ENEMIES + 1) * 2 + 1   # 35
    INPUT_SIZE = STATE_SIZE + 1                                 # 36
    HIDDEN = 32
    MAX_ACTION = 9
    BATCH = 2

    key = jax.random.PRNGKey(0)
    k_param, k_state, k_big = jax.random.split(key, 3)
    params = init_params(k_param, INPUT_SIZE, HIDDEN, MAX_ACTION)

    def reference(xx, p):  # plain-JAX unfused 3-layer (matches PyTorch forward)
        h1 = jnp.maximum(xx @ p["w1"] + p["b1"], 0.0)
        h2 = h1 @ p["w2"] + p["b2"]
        return h2 @ p["w3"] + p["b3"]

    # ----- Test 1: tiny batch (B=2), f32 path --------------------------------
    ks = jax.random.split(k_state, BATCH)
    rows = []
    for b in range(BATCH):
        kk = jax.random.split(ks[b], 5)
        row = fuse_state_ref(
            time=float(b) + 0.5,
            player_coord=jax.random.uniform(kk[0], (2,)),
            player_hp=3.0,
            enemy_coord=jax.random.uniform(kk[1], (MAX_ENEMIES, 2)),
            bullet_coord=jax.random.uniform(kk[2], (MAX_BULLETS, 2)),
            bullet_angle=jax.random.uniform(kk[3], (MAX_BULLETS,)),
        )
        assert row.shape == (INPUT_SIZE,)
        rows.append(row)
    x_small = jnp.stack(rows).astype(jnp.float32)   # [2, 36]

    w1b, w23b, out_dim = pack_params(params)        # f32 slabs
    q = jax.block_until_ready(qnetwork_forward(x_small, w1b, w23b, out_dim))
    q_ref = reference(x_small, params)
    assert q.shape == (BATCH, MAX_ACTION)
    assert jnp.allclose(q, q_ref, atol=1e-4, rtol=1e-4)

    # ----- Test 2: larger batch exercising the tiled grid (grid=(2,)) --------
    BIG = 250
    x_big = jax.random.uniform(k_big, (BIG, INPUT_SIZE), jnp.float32, -1.0, 1.0)
    q_big = jax.block_until_ready(
        qnetwork_forward(x_big, w1b, w23b, out_dim, block_batch=128))
    assert q_big.shape == (BIG, MAX_ACTION)
    assert jnp.allclose(q_big, reference(x_big, params), atol=1e-4, rtol=1e-4)

    # ----- Test 3: optional bf16-weight fast path (f32 accumulation) ---------
    w1b_bf, w23b_bf, _ = pack_params(params, compute_dtype=jnp.bfloat16)
    q_bf = jax.block_until_ready(
        qnetwork_forward(x_big, w1b_bf, w23b_bf, out_dim, block_batch=128))
    # bf16-consistent plain-JAX reference (same cast points, same f32 accum)
    h1_bf = jnp.maximum(
        jnp.dot(x_big.astype(jnp.bfloat16), w1b_bf[:INPUT_SIZE, :],
                preferred_element_type=jnp.float32)
        + w1b_bf[INPUT_SIZE:, :].astype(jnp.float32), 0.0)
    q_bf_ref = (jnp.dot(h1_bf.astype(jnp.bfloat16), w23b_bf[:HIDDEN, :],
                        preferred_element_type=jnp.float32)
                + w23b_bf[HIDDEN:, :].astype(jnp.float32))[:, :MAX_ACTION]
    assert jnp.allclose(q_bf, q_bf_ref, atol=1e-2, rtol=1e-2)

    print("KERNEL_OK")
</pallas_src>

<mosaic_0001>
module attributes {stable_mosaic.version = 11 : i64} {
  func.func @qnetwork_kernel(%arg0: i32, %arg1: memref<8x36xf32, #tpu.memory_space<vmem>>, %arg2: memref<37x32xf32, #tpu.memory_space<vmem>>, %arg3: memref<33x16xf32, #tpu.memory_space<vmem>>, %arg4: memref<8x16xf32, #tpu.memory_space<vmem>>) attributes {dimension_semantics = [#tpu.dimension_semantics<parallel>], iteration_bounds = array<i64: 1>, scalar_prefetch = 0 : i64, scratch_operands = 0 : i64, tpu.core_type = #tpu.core_type<tc>, window_params = [{transform_indices = @transform_0, window_bounds = array<i64: 8, 36>}, {pipeline_mode = #tpu.pipeline_mode<synchronous>, transform_indices = @transform_1, window_bounds = array<i64: 37, 32>}, {pipeline_mode = #tpu.pipeline_mode<synchronous>, transform_indices = @transform_2, window_bounds = array<i64: 33, 16>}, {transform_indices = @transform_3, window_bounds = array<i64: 8, 16>}]} {
    %c0 = arith.constant 0 : index
    %c0_0 = arith.constant 0 : index
    %0 = vector.load %arg1[%c0, %c0_0] : memref<8x36xf32, #tpu.memory_space<vmem>>, vector<8x36xf32>
    %c0_1 = arith.constant 0 : index
    %c0_2 = arith.constant 0 : index
    %1 = vector.load %arg2[%c0_1, %c0_2] : memref<37x32xf32, #tpu.memory_space<vmem>>, vector<36x32xf32>
    %cst = arith.constant dense<0.000000e+00> : vector<8x32xf32>
    %2 = tpu.matmul %0, %1, %cst {dimension_numbers = #tpu.dot_dimension_numbers<[1], [0], [0], [1], [0, 0, 1, 1], [], []>} : vector<8x36xf32>, vector<36x32xf32>, vector<8x32xf32> -> vector<8x32xf32>
    %c36 = arith.constant 36 : index
    %c0_3 = arith.constant 0 : index
    %3 = vector.load %arg2[%c36, %c0_3] : memref<37x32xf32, #tpu.memory_space<vmem>>, vector<1x32xf32>
    %4 = vector.broadcast %3 : vector<1x32xf32> to vector<8x32xf32>
    %5 = arith.addf %2, %4 : vector<8x32xf32>
    %cst_4 = arith.constant 0.000000e+00 : f32
    %6 = vector.broadcast %cst_4 : f32 to vector<8x32xf32>
    %7 = arith.maximumf %5, %6 : vector<8x32xf32>
    %c0_5 = arith.constant 0 : index
    %c0_6 = arith.constant 0 : index
    %8 = vector.load %arg3[%c0_5, %c0_6] : memref<33x16xf32, #tpu.memory_space<vmem>>, vector<32x16xf32>
    %cst_7 = arith.constant dense<0.000000e+00> : vector<8x16xf32>
    %9 = tpu.matmul %7, %8, %cst_7 {dimension_numbers = #tpu.dot_dimension_numbers<[1], [0], [0], [1], [0, 0, 1, 1], [], []>} : vector<8x32xf32>, vector<32x16xf32>, vector<8x16xf32> -> vector<8x16xf32>
    %c32 = arith.constant 32 : index
    %c0_8 = arith.constant 0 : index
    %10 = vector.load %arg3[%c32, %c0_8] : memref<33x16xf32, #tpu.memory_space<vmem>>, vector<1x16xf32>
    %11 = vector.broadcast %10 : vector<1x16xf32> to vector<8x16xf32>
    %12 = arith.addf %9, %11 : vector<8x16xf32>
    %c0_9 = arith.constant 0 : index
    %c0_10 = arith.constant 0 : index
    %13 = vector.load %arg4[%c0_9, %c0_10] : memref<8x16xf32, #tpu.memory_space<vmem>>, vector<8x16xf32>
    tpu.vector_store %arg4[%c0_9, %c0_10], %12 {strides = array<i32>} : memref<8x16xf32, #tpu.memory_space<vmem>>, vector<8x16xf32>,
    return
  }
  func.func @transform_0(%arg0: i32) -> (i32, i32) {
    %c0_i32 = arith.constant 0 : i32
    %c0_i32_0 = arith.constant 0 : i32
    return %arg0, %c0_i32 : i32, i32
  }
  func.func @transform_1(%arg0: i32) -> (i32, i32) {
    %c0_i32 = arith.constant 0 : i32
    %c0_i32_0 = arith.constant 0 : i32
    %c0_i32_1 = arith.constant 0 : i32
    return %c0_i32, %c0_i32_0 : i32, i32
  }
  func.func @transform_2(%arg0: i32) -> (i32, i32) {
    %c0_i32 = arith.constant 0 : i32
    %c0_i32_0 = arith.constant 0 : i32
    %c0_i32_1 = arith.constant 0 : i32
    return %c0_i32, %c0_i32_0 : i32, i32
  }
  func.func @transform_3(%arg0: i32) -> (i32, i32) {
    %c0_i32 = arith.constant 0 : i32
    %c0_i32_0 = arith.constant 0 : i32
    return %arg0, %c0_i32 : i32, i32
  }
}

</mosaic_0001>

<llo_original>
// kernel: tpu_custom_call.1
$region0: #{tpu_custom_call.1}
  #allocation0 [shape = 'u32[]', space=smem, size = 0x4, offset = 0x4, fixed_abs, tag = 'smem constant byte address 0x4 - core index']
  #allocation1 [shape = 'u32[144,128]{1,0:T(1,128)}', space=vmem, size = 0x12000, scoped, tag = 'internal scratch']
  %s0 = inlined_call_operand.vmem [shape: f32[8,36], index: 0, kind: input, shape index: {}]
  %s1 = inlined_call_operand.vmem [shape: f32[37,32], index: 1, kind: input, shape index: {}]
  %s2 = inlined_call_operand.vmem [shape: f32[33,16], index: 2, kind: input, shape index: {}]
  %s3 = inlined_call_operand.hbm [shape: f32[8,16], index: 3, kind: output, shape index: {}]
  %s4 = sld [smem:[#allocation0]]
  $region22: #{tpu_custom_call.1} parent=0
    _
  %s6 = ssub.s32 1, %s4
  %s7 = scalar_select 0, %s6, %s4
  $region1: #{tpu_custom_call.1} parent=0
    #allocation2 [shape = 'u8[4096]{0}', space=vmem, size = 0x1000, scoped, tag = 'output window, operand 0, single buffered']
    #allocation3 [shape = 's32[1]{0}', space=sflag, size = 0x4, scoped, tag = 'scoped memory for tpu_custom_call.1']
    %8 = vsyncpa [#allocation3], 0
    // Predicated region
    $region2: #{tpu_custom_call.1} parent=1 // pred_check
      _
    $region3: #{tpu_custom_call.1} parent=1 // pred_check_branch
      %10 = sbr.rel (0) target = $region5
    $region4: #{tpu_custom_call.1} parent=1 // pred_region
      _
    $region5: #{tpu_custom_call.1} parent=1 // pred_fallthru
      _
    // Predicated region
    $region6: #{tpu_custom_call.1} parent=1 // pred_check
      _
    $region7: #{tpu_custom_call.1} parent=1 // pred_check_branch
      %12 = sbr.rel (0) target = $region9
    $region8: #{tpu_custom_call.1} parent=1 // pred_region
      _
    $region9: #{tpu_custom_call.1} parent=1 // pred_fallthru
      _
    // Predicated region
    $region10: #{tpu_custom_call.1} parent=1 // pred_check
      _
    $region11: #{tpu_custom_call.1} parent=1 // pred_check_branch
      %14 = sbr.rel (0) target = $region13
    $region12: #{tpu_custom_call.1} parent=1 // pred_region
      _
    $region13: #{tpu_custom_call.1} parent=1 // pred_fallthru
      _
    %v15 = vld [vmem:[%s0] sm:$0xff]
    %v16 = vld [vmem:[%s1] sm:$0xff]
    %v17 = vld [vmem:[%s1 + $0x8] sm:$0xff]
    %v18 = vld [vmem:[%s1 + $0x10] sm:$0xff]
    %v19 = vld [vmem:[%s1 + $0x18] sm:$0xff]
    %v20 = vld [vmem:[%s1 + $0x20] sm:$0xf]
    %v21 = vld [vmem:[%s1 + $0x24] sm:$0x1]
    %v22 = vlaneseq
    %v23 = vshrl.u32 %v22, 7
    %v24 = vsub.s32 0, %v23
    %v25 = vrot.slane %v21, %v24
    %vm26 = vcmask 293888
    %v28 = vsel %vm26, %v15, 0
    %vm30 = vcmask 1043456
    %v32 = vsel %vm30, %v20, 0
    %34 = vmatprep.subr.mxu0 0.0
    %35 = vmatpush1.msra.mxu0 %v16
    %36 = vmatprep.subr.mxu0 0.0
    %37 = vmatpush1.msra.mxu0 %v17
    %38 = vmatprep.subr.mxu0 0.0
    %39 = vmatpush1.msra.mxu0 %v18
    %40 = vmatprep.subr.mxu0 0.0
    %41 = vmatpush1.msra.mxu0 %v19
    %42 = vmatprep.subr.mxu0 0.0
    %43 = vmatpush1.msra.mxu0 %v32
    %44 = vmatprep.subr.mxu0 0.0
    %45 = vmatpush1.msra.mxu0 0.0
    %46 = vmatprep.subr.mxu0 0.0
    %47 = vmatpush1.msra.mxu0 0.0
    %48 = vmatprep.subr.mxu0 0.0
    %49 = vmatpush1.msra.mxu0 0.0
    %50 = vmatprep.subr.mxu0 0.0
    %51 = vmatpush1.msra.mxu0 0.0
    %52 = vmatprep.subr.mxu0 0.0
    %53 = vmatpush1.msra.mxu0 0.0
    %54 = vmatprep.subr.mxu0 0.0
    %55 = vmatpush1.msra.mxu0 0.0
    %56 = vmatprep.subr.mxu0 0.0
    %57 = vmatpush1.msra.mxu0 0.0
    %58 = vmatprep.subr.mxu0 0.0
    %59 = vmatpush1.msra.mxu0 0.0
    %60 = vmatprep.subr.mxu0 0.0
    %61 = vmatpush1.msra.mxu0 0.0
    %62 = vmatprep.subr.mxu0 0.0
    %63 = vmatpush1.msra.mxu0 0.0
    %64 = vmatprep.subr.mxu0 0.0
    %65 = vmatpush1.msra.mxu0 0.0
    %66 = vmatprep.subr.mxu0 0.0
    %67 = vmatpush1.msra.mxu0 0.0
    %68 = vmatprep.subr.mxu0 0.0
    %69 = vmatpush1.msra.mxu0 0.0
    %70 = vmatprep.subr.mxu0 0.0
    %71 = vmatpush1.msra.mxu0 0.0
    %72 = vmatprep.subr.mxu0 0.0
    %73 = vmatpush1.msra.mxu0 0.0
    %74 = vmatprep.subr.mxu0 0.0
    %75 = vmatpush1.msra.mxu0 0.0
    %76 = vmatprep.subr.mxu0 0.0
    %77 = vmatpush1.msra.mxu0 0.0
    %78 = vmatprep.subr.mxu0 0.0
    %79 = vmatpush1.msra.mxu0 0.0
    %80 = vmatprep.subr.mxu0 0.0
    %81 = vmatpush1.msra.mxu0 0.0
    %82 = vmatprep.subr.mxu0 0.0
    %83 = vmatpush1.msra.mxu0 0.0
    %84 = vmatprep.subr.mxu0 0.0
    %85 = vmatpush1.msra.mxu0 0.0
    %86 = vmatprep.subr.mxu0 0.0
    %87 = vmatpush1.msra.mxu0 0.0
    %88 = vmatprep.subr.mxu0 0.0
    %89 = vmatpush1.msra.mxu0 0.0
    %90 = vmatprep.subr.mxu0 0.0
    %91 = vmatpush1.msra.mxu0 0.0
    %92 = vmatprep.subr.mxu0 0.0
    %93 = vmatpush1.msra.mxu0 0.0
    %94 = vmatprep.subr.mxu0 0.0
    %95 = vmatpush1.msra.mxu0 0.0
    %96 = vmatprep.subr.mxu0 0.0
    %97 = vmatpush1.msra.mxu0 0.0
    %98 = vmatprep.mubr.f32.mxu0 0.0
    %99 = vmatmul.mubr.f32.gmra.mrb[0].mxu0 %v28
    %v100 = vpop.f32.mrb[0].mxu0
    %v101 = vadd.f32 %v25, %v100
    %v102 = vpop.f32.mrb[0].mxu0
    %103 = vdwg.mxu0
    %v104 = vmax.f32 %v101, 0.0
    %v105 = vld [vmem:[%s2] sm:$0xff]
    %v106 = vld [vmem:[%s2 + $0x8] sm:$0xff]
    %v107 = vld [vmem:[%s2 + $0x10] sm:$0xff]
    %v108 = vld [vmem:[%s2 + $0x18] sm:$0xff]
    %v109 = vld [vmem:[%s2 + $0x20] sm:$0x1]
    %v110 = vlaneseq
    %v111 = vshrl.u32 %v110, 7
    %v112 = vsub.s32 0, %v111
    %v113 = vrot.slane %v109, %v112
    %vm114 = vcmask 261120
    %v116 = vsel %vm114, %v104, 0
    %118 = vmatprep.subr.mxu0 0.0
    %119 = vmatpush1.msra.mxu0 %v105
    %120 = vmatprep.subr.mxu0 0.0
    %121 = vmatpush1.msra.mxu0 %v106
    %122 = vmatprep.subr.mxu0 0.0
    %123 = vmatpush1.msra.mxu0 %v107
    %124 = vmatprep.subr.mxu0 0.0
    %125 = vmatpush1.msra.mxu0 %v108
    %126 = vmatprep.subr.mxu0 0.0
    %127 = vmatpush1.msra.mxu0 0.0
    %128 = vmatprep.subr.mxu0 0.0
    %129 = vmatpush1.msra.mxu0 0.0
    %130 = vmatprep.subr.mxu0 0.0
    %131 = vmatpush1.msra.mxu0 0.0
    %132 = vmatprep.subr.mxu0 0.0
    %133 = vmatpush1.msra.mxu0 0.0
    %134 = vmatprep.subr.mxu0 0.0
    %135 = vmatpush1.msra.mxu0 0.0
    %136 = vmatprep.subr.mxu0 0.0
    %137 = vmatpush1.msra.mxu0 0.0
    %138 = vmatprep.subr.mxu0 0.0
    %139 = vmatpush1.msra.mxu0 0.0
    %140 = vmatprep.subr.mxu0 0.0
    %141 = vmatpush1.msra.mxu0 0.0
    %142 = vmatprep.subr.mxu0 0.0
    %143 = vmatpush1.msra.mxu0 0.0
    %144 = vmatprep.subr.mxu0 0.0
    %145 = vmatpush1.msra.mxu0 0.0
    %146 = vmatprep.subr.mxu0 0.0
    %147 = vmatpush1.msra.mxu0 0.0
    %148 = vmatprep.subr.mxu0 0.0
    %149 = vmatpush1.msra.mxu0 0.0
    %150 = vmatprep.subr.mxu0 0.0
    %151 = vmatpush1.msra.mxu0 0.0
    %152 = vmatprep.subr.mxu0 0.0
    %153 = vmatpush1.msra.mxu0 0.0
    %154 = vmatprep.subr.mxu0 0.0
    %155 = vmatpush1.msra.mxu0 0.0
    %156 = vmatprep.subr.mxu0 0.0
    %157 = vmatpush1.msra.mxu0 0.0
    %158 = vmatprep.subr.mxu0 0.0
    %159 = vmatpush1.msra.mxu0 0.0
    %160 = vmatprep.subr.mxu0 0.0
    %161 = vmatpush1.msra.mxu0 0.0
    %162 = vmatprep.subr.mxu0 0.0
    %163 = vmatpush1.msra.mxu0 0.0
    %164 = vmatprep.subr.mxu0 0.0
    %165 = vmatpush1.msra.mxu0 0.0
    %166 = vmatprep.subr.mxu0 0.0
    %167 = vmatpush1.msra.mxu0 0.0
    %168 = vmatprep.subr.mxu0 0.0
    %169 = vmatpush1.msra.mxu0 0.0
    %170 = vmatprep.subr.mxu0 0.0
    %171 = vmatpush1.msra.mxu0 0.0
    %172 = vmatprep.subr.mxu0 0.0
    %173 = vmatpush1.msra.mxu0 0.0
    %174 = vmatprep.subr.mxu0 0.0
    %175 = vmatpush1.msra.mxu0 0.0
    %176 = vmatprep.subr.mxu0 0.0
    %177 = vmatpush1.msra.mxu0 0.0
    %178 = vmatprep.subr.mxu0 0.0
    %179 = vmatpush1.msra.mxu0 0.0
    %180 = vmatprep.subr.mxu0 0.0
    %181 = vmatpush1.msra.mxu0 0.0
    %182 = vmatprep.mubr.f32.mxu0 0.0
    %183 = vmatmul.mubr.f32.gmra.mrb[0].mxu0 %v116
    %v184 = vpop.f32.mrb[0].mxu0
    %v185 = vadd.f32 %v113, %v184
    %v186 = vpop.f32.mrb[0].mxu0
    %187 = vdwg.mxu0
    %vm188 = vcmask 130048
    %189 = vst.msk [vmem:[#allocation2] sm:$0xff] %vm188, %v185
    // Predicated region
    $region14: #{tpu_custom_call.1} parent=1 // pred_check
      _
    $region15: #{tpu_custom_call.1} parent=1 // pred_check_branch
      %191 = sbr.rel (0) target = $region17
    $region16: #{tpu_custom_call.1} parent=1 // pred_region
      %s193 = ssub.s32 128, 128
      %194 = vsyncadd [#allocation3], %s193
      %s196 = sshll.u32 [#allocation2], 4
      %s197 = int_to_ptr.vmem [resolvable:$true] %s196
      %199 = dma.vmem_to_hbm [thread:$0]  %s197, 128, %s3, [#allocation3]
    $region17: #{tpu_custom_call.1} parent=1 // pred_fallthru
      _
    // Predicated region
    $region18: #{tpu_custom_call.1} parent=1 // pred_check
      _
    $region19: #{tpu_custom_call.1} parent=1 // pred_check_branch
      %201 = sbr.rel (0) target = $region21
    $region20: #{tpu_custom_call.1} parent=1 // pred_region
      %202 = dma.done [#allocation3], 128
    $region21: #{tpu_custom_call.1} parent=1 // pred_fallthru
      _
    %203 = vsyncpa [#allocation3], 1

</llo_original>
